<compile_context>
chip_gen: v7x
topology: tpu7x:2x2x1
jax: 0.10.0
libtpu: 0.0.40
codegen_flags: <defaults>
</compile_context>

<pallas_src>
import functools

import numpy as np
import jax
import jax.numpy as jnp
from jax import lax
from jax.experimental import pallas as pl
from jax.experimental.pallas import tpu as pltpu

NUM_HEADS = 1


def _spe_attention_kernel(xf_ref, packed_ref, wprojb_ref, bmask_ref, kmask_ref,
                          out_ref, *, Wp):
    """One grid step = `bb` images folded onto the sublane axis.

    xf_ref    : (bb*C, Npad) zero-padded images flattened to Hp*Wp lanes, then
                right-padded with zeros to Npad (multiple of 128).
    packed_ref: (bb*C, 32) = [wq*scale | wk | wv | bq*scale | bk | bv |
                              bn_scale | bn_shift]   (per-channel, tiled per image)
    wprojb_ref: (bb*C, bb*C) block-diagonal 1x1 projection weight.
    bmask_ref : (bb*C, bb*C) additive logits mask: 0 on same-image blocks,
                -1e30 on cross-image blocks.
    kmask_ref : (1, Npad) 1.0 at interior (real-pixel) flat positions, else 0.
    out_ref   : (bb*C, Npad) result on the padded grid (wrapper crops border).
    """
    bbC, Npad = out_ref.shape

    packed = packed_ref[...]                         # (bbC, 32) — one vreg of params
    wq, wk, wv = packed[:, 0:9], packed[:, 9:18], packed[:, 18:27]
    bq, bk, bv = packed[:, 27:28], packed[:, 28:29], packed[:, 29:30]
    bn_scale, bn_shift = packed[:, 30:31], packed[:, 31:32]
    wproj_blk = wprojb_ref[...]                      # (bbC, bbC)
    blockmask = bmask_ref[...]                       # (bbC, bbC)
    kmask = kmask_ref[...]                           # (1, Npad), broadcast over rows

    # Single aligned load of the whole slab; shifted conv-tap windows are lane
    # rotations (XLU) of it.  Rotation wrap-around only affects border / pad
    # lanes, which never reach the final (cropped) output.
    x_all = xf_ref[...].astype(jnp.float32)          # (bbC, Npad)

    q = jnp.zeros((bbC, Npad), jnp.float32)
    k = jnp.zeros((bbC, Npad), jnp.float32)
    v = jnp.zeros((bbC, Npad), jnp.float32)
    for dh in range(3):
        for dw in range(3):
            t = dh * 3 + dw
            delta = (dh - 1) * Wp + (dw - 1)         # static lane offset of this tap
            if delta == 0:
                win = x_all
            else:
                # win[:, n] == x_all[:, (n + delta) % Npad]
                win = pltpu.roll(x_all, (-delta) % Npad, 1)
            q = q + win * wq[:, t:t + 1]
            k = k + win * wk[:, t:t + 1]
            v = v + win * wv[:, t:t + 1]
    q = q + bq                      # attention scale already folded into wq / bq
    k = (k + bk) * kmask            # zero border/pad lanes -> no logits contribution
    v = v + bv                      # no mask: bad lanes only hit cropped outputs

    # Channel attention for all bb images in one MXU dot, contracting the flat
    # spatial axis; cross-image blocks are knocked out additively before softmax.
    logits = lax.dot_general(q, k, (((1,), (1,)), ((), ())),
                             preferred_element_type=jnp.float32)    # (bbC, bbC)
    logits = logits + blockmask
    logits = logits - jnp.max(logits, axis=-1, keepdims=True)
    p = jnp.exp(logits)
    # approx=True (EUP fast path) is too coarse for the 1e-4 check; exact is cheap.
    attn = p * pl.reciprocal(jnp.sum(p, axis=-1, keepdims=True), approx=False)

    # Fuse the 1x1 projection: (wproj @ attn) @ v == wproj @ (attn @ v).
    # Both wproj_blk and attn are block-diagonal, so images stay independent.
    m = jnp.dot(wproj_blk, attn, preferred_element_type=jnp.float32)  # (bbC, bbC)
    y = jnp.dot(m, v, preferred_element_type=jnp.float32)             # (bbC, Npad)
    y = y * bn_scale + bn_shift                                       # folded BatchNorm (eval)
    out_ref[...] = y.astype(out_ref.dtype)                            # dense, unmasked store


def spe_attention(x, params, *, batch_block=1):
    """SPEAttention forward.

    batch_block images per grid step.  v7x: keep grid length >= 2 so both
    TensorCores get work.  v5e/v6e: raise batch_block to amortize grid-step
    overhead (single TC).
    """
    B, C, H, W = x.shape
    bb = batch_block
    assert B % bb == 0
    bbC = bb * C
    assert bbC % 8 == 0, "sublane block (batch_block * C) must be a multiple of 8"
    head_dim = C // NUM_HEADS
    scale = float(head_dim) ** (-0.5)
    Hp, Wp = H + 2, W + 2
    N = Hp * Wp
    Npad = ((N + 127) // 128) * 128          # lane-dense flat axis (324 -> 384)
    f32 = jnp.float32

    # Zero-pad spatially (3x3 conv halo), flatten (Hp, Wp) onto the lane axis,
    # right-pad to Npad, and fold batch into the sublane axis.  The pads /
    # reshapes fuse into a single XLA copy pass; no extra +/-S end padding is
    # needed anymore since conv taps are built with in-kernel lane rotations.
    xp = jnp.pad(x, ((0, 0), (0, 0), (1, 1), (1, 1))).reshape(B, C, N)
    xf = jnp.pad(xp, ((0, 0), (0, 0), (0, Npad - N))).reshape(B * C, Npad)

    # Per-channel params packed into one (bbC, 32) slab; scale folded into wq/bq.
    packed_c = jnp.concatenate([
        (scale * params["wq"]).reshape(C, 9).astype(f32),
        params["wk"].reshape(C, 9).astype(f32),
        params["wv"].reshape(C, 9).astype(f32),
        (scale * params["bq"]).reshape(C, 1).astype(f32),
        params["bk"].reshape(C, 1).astype(f32),
        params["bv"].reshape(C, 1).astype(f32),
        params["bn_scale"].reshape(C, 1).astype(f32),
        params["bn_shift"].reshape(C, 1).astype(f32),
    ], axis=1)
    packed = jnp.tile(packed_c, (bb, 1))                               # (bbC, 32)

    # Block-diagonal 1x1 projection and additive cross-image logits mask.
    wproj_blk = jnp.kron(jnp.eye(bb, dtype=f32), params["wproj"].astype(f32))
    same_img = np.kron(np.eye(bb, dtype=np.float32), np.ones((C, C), np.float32))
    blockmask = jnp.asarray(np.where(same_img > 0, 0.0, -1e30).astype(np.float32))

    # Interior (real-pixel) flat positions on the padded grid; zero on the
    # border rows/cols and on the Npad-N extra lanes.  (1, Npad): negligible DMA.
    m2d = np.zeros((Hp, Wp), np.float32)
    m2d[1:H + 1, 1:W + 1] = 1.0
    kmask = jnp.asarray(np.pad(m2d.reshape(1, N), ((0, 0), (0, Npad - N))))

    kernel = functools.partial(_spe_attention_kernel, Wp=Wp)
    y_flat = pl.pallas_call(
        kernel,
        out_shape=jax.ShapeDtypeStruct((B * C, Npad), x.dtype),
        grid=(B // bb,),
        in_specs=[
            pl.BlockSpec((bbC, Npad), lambda b: (b, 0)),     # images (sublane-folded)
            pl.BlockSpec((bbC, 32), lambda b: (0, 0)),       # packed per-channel params
            pl.BlockSpec((bbC, bbC), lambda b: (0, 0)),      # block-diag wproj
            pl.BlockSpec((bbC, bbC), lambda b: (0, 0)),      # cross-image logits mask
            pl.BlockSpec((1, Npad), lambda b: (0, 0)),       # interior lane mask
        ],
        out_specs=pl.BlockSpec((bbC, Npad), lambda b: (b, 0)),
        compiler_params=pltpu.CompilerParams(
            dimension_semantics=("parallel",),
            vmem_limit_bytes=32 * 1024 * 1024),              # safe on v5e/v6e/v7x
    )(xf, packed, wproj_blk, blockmask, kmask)

    # Kernel output lives on the (lane-padded) padded grid; crop outside the
    # kernel (pure XLA layout plumbing, fuses into one copy) and return NCHW.
    y = y_flat.reshape(B, C, Npad)[:, :, :N].reshape(B, C, Hp, Wp)
    return y[:, :, 1:H + 1, 1:W + 1]


def reference(x, params):
    """Pure-JAX reference matching the PyTorch forward (eval mode)."""
    B, C, H, W = x.shape
    scale = float(C // NUM_HEADS) ** (-0.5)

    def dw(w, b):
        y = lax.conv_general_dilated(
            x, w[:, None, :, :], window_strides=(1, 1),
            padding=((1, 1), (1, 1)),
            dimension_numbers=("NCHW", "OIHW", "NCHW"),
            feature_group_count=C)
        return (y + b[None, :, None, None]).reshape(B, C, H * W)

    q = dw(params["wq"], params["bq"])                  # (B, C, HW)
    k = dw(params["wk"], params["bk"])                  # (B, C, HW)
    v = dw(params["wv"], params["bv"])                  # (B, C, HW)
    attn = jnp.einsum("bcn,bdn->bcd", q, k) * scale     # (B, C, C)
    attn = jax.nn.softmax(attn, axis=-1)
    out = jnp.einsum("bcd,bdn->bcn", attn, v)           # (B, C, HW)
    proj = jnp.einsum("oc,bcn->bon", params["wproj"], out)
    y = proj * params["bn_scale"][None, :, None] + params["bn_shift"][None, :, None]
    return y.reshape(B, C, H, W)


if __name__ == "__main__":
    B, C, H, W = 2, 8, 16, 16   # dim = 8, num_heads = 1
    key = jax.random.PRNGKey(0)
    ks = jax.random.split(key, 12)

    x = jax.random.normal(ks[0], (B, C, H, W), jnp.float32)

    params = {
        "wq": 0.2 * jax.random.normal(ks[1], (C, 3, 3), jnp.float32),
        "wk": 0.2 * jax.random.normal(ks[2], (C, 3, 3), jnp.float32),
        "wv": 0.2 * jax.random.normal(ks[3], (C, 3, 3), jnp.float32),
        "bq": 0.1 * jax.random.normal(ks[4], (C,), jnp.float32),
        "bk": 0.1 * jax.random.normal(ks[5], (C,), jnp.float32),
        "bv": 0.1 * jax.random.normal(ks[6], (C,), jnp.float32),
        "wproj": 0.2 * jax.random.normal(ks[7], (C, C), jnp.float32),
    }
    # BatchNorm2d (eval): fold gamma/beta/running stats into scale & shift.
    bn_gamma = 1.0 + 0.1 * jax.random.normal(ks[8], (C,), jnp.float32)
    bn_beta = 0.1 * jax.random.normal(ks[9], (C,), jnp.float32)
    bn_mean = 0.1 * jax.random.normal(ks[10], (C,), jnp.float32)
    bn_var = jnp.abs(jax.random.normal(ks[11], (C,), jnp.float32)) + 0.5
    eps = 1e-5
    inv_std = 1.0 / jnp.sqrt(bn_var + eps)
    params["bn_scale"] = bn_gamma * inv_std
    params["bn_shift"] = bn_beta - bn_mean * bn_gamma * inv_std

    ref = jax.block_until_ready(reference(x, params))

    # batch_block=1: grid=(2,) parallel -> both TensorCores busy on v7x.
    # batch_block=2: whole batch per step -> amortizes grid overhead on v5e/v6e
    #                and exercises the batched (block-diagonal) MXU dots.
    for bb in (1, 2):
        out = jax.block_until_ready(spe_attention(x, params, batch_block=bb))
        assert out.shape == (B, C, H, W)
        np.testing.assert_allclose(np.asarray(out), np.asarray(ref),
                                   rtol=1e-4, atol=1e-4)
    print("KERNEL_OK")
</pallas_src>

<mosaic_0001>
module attributes {stable_mosaic.version = 11 : i64} {
  func.func @_spe_attention_kernel(%arg0: i32, %arg1: memref<8x384xf32, #tpu.memory_space<vmem>>, %arg2: memref<8x32xf32, #tpu.memory_space<vmem>>, %arg3: memref<8x8xf32, #tpu.memory_space<vmem>>, %arg4: memref<8x8xf32, #tpu.memory_space<vmem>>, %arg5: memref<1x384xf32, #tpu.memory_space<vmem>>, %arg6: memref<8x384xf32, #tpu.memory_space<vmem>>) attributes {dimension_semantics = [#tpu.dimension_semantics<parallel>], iteration_bounds = array<i64: 2>, scalar_prefetch = 0 : i64, scratch_operands = 0 : i64, tpu.core_type = #tpu.core_type<tc>, window_params = [{transform_indices = @transform_0, window_bounds = array<i64: 8, 384>}, {pipeline_mode = #tpu.pipeline_mode<synchronous>, transform_indices = @transform_1, window_bounds = array<i64: 8, 32>}, {pipeline_mode = #tpu.pipeline_mode<synchronous>, transform_indices = @transform_2, window_bounds = array<i64: 8, 8>}, {pipeline_mode = #tpu.pipeline_mode<synchronous>, transform_indices = @transform_3, window_bounds = array<i64: 8, 8>}, {pipeline_mode = #tpu.pipeline_mode<synchronous>, transform_indices = @transform_4, window_bounds = array<i64: 1, 384>}, {transform_indices = @transform_5, window_bounds = array<i64: 8, 384>}]} {
    %c0 = arith.constant 0 : index
    %c0_0 = arith.constant 0 : index
    %0 = vector.load %arg2[%c0, %c0_0] : memref<8x32xf32, #tpu.memory_space<vmem>>, vector<8x32xf32>
    %1 = vector.extract_strided_slice %0 {offsets = [0, 0], sizes = [8, 9], strides = [1, 1]} : vector<8x32xf32> to vector<8x9xf32>
    %2 = vector.extract_strided_slice %0 {offsets = [0, 9], sizes = [8, 9], strides = [1, 1]} : vector<8x32xf32> to vector<8x9xf32>
    %3 = vector.extract_strided_slice %0 {offsets = [0, 18], sizes = [8, 9], strides = [1, 1]} : vector<8x32xf32> to vector<8x9xf32>
    %4 = vector.extract_strided_slice %0 {offsets = [0, 27], sizes = [8, 1], strides = [1, 1]} : vector<8x32xf32> to vector<8x1xf32>
    %5 = vector.extract_strided_slice %0 {offsets = [0, 28], sizes = [8, 1], strides = [1, 1]} : vector<8x32xf32> to vector<8x1xf32>
    %6 = vector.extract_strided_slice %0 {offsets = [0, 29], sizes = [8, 1], strides = [1, 1]} : vector<8x32xf32> to vector<8x1xf32>
    %7 = vector.extract_strided_slice %0 {offsets = [0, 30], sizes = [8, 1], strides = [1, 1]} : vector<8x32xf32> to vector<8x1xf32>
    %8 = vector.extract_strided_slice %0 {offsets = [0, 31], sizes = [8, 1], strides = [1, 1]} : vector<8x32xf32> to vector<8x1xf32>
    %c0_1 = arith.constant 0 : index
    %c0_2 = arith.constant 0 : index
    %9 = vector.load %arg3[%c0_1, %c0_2] : memref<8x8xf32, #tpu.memory_space<vmem>>, vector<8x8xf32>
    %c0_3 = arith.constant 0 : index
    %c0_4 = arith.constant 0 : index
    %10 = vector.load %arg4[%c0_3, %c0_4] : memref<8x8xf32, #tpu.memory_space<vmem>>, vector<8x8xf32>
    %c0_5 = arith.constant 0 : index
    %c0_6 = arith.constant 0 : index
    %11 = vector.load %arg5[%c0_5, %c0_6] : memref<1x384xf32, #tpu.memory_space<vmem>>, vector<1x384xf32>
    %c0_7 = arith.constant 0 : index
    %c0_8 = arith.constant 0 : index
    %12 = vector.load %arg1[%c0_7, %c0_8] : memref<8x384xf32, #tpu.memory_space<vmem>>, vector<8x384xf32>
    %cst = arith.constant 0.000000e+00 : f32
    %13 = vector.broadcast %cst : f32 to vector<8x384xf32>
    %cst_9 = arith.constant 0.000000e+00 : f32
    %14 = vector.broadcast %cst_9 : f32 to vector<8x384xf32>
    %cst_10 = arith.constant 0.000000e+00 : f32
    %15 = vector.broadcast %cst_10 : f32 to vector<8x384xf32>
    %c19_i32 = arith.constant 19 : i32
    %16 = tpu.dynamic_rotate %12 by %c19_i32 dim 1 : vector<8x384xf32>, i32 -> vector<8x384xf32>
    %17 = vector.extract_strided_slice %1 {offsets = [0, 0], sizes = [8, 1], strides = [1, 1]} : vector<8x9xf32> to vector<8x1xf32>
    %18 = vector.broadcast %17 : vector<8x1xf32> to vector<8x384xf32>
    %19 = arith.mulf %16, %18 : vector<8x384xf32>
    %20 = arith.addf %13, %19 : vector<8x384xf32>
    %21 = vector.extract_strided_slice %2 {offsets = [0, 0], sizes = [8, 1], strides = [1, 1]} : vector<8x9xf32> to vector<8x1xf32>
    %22 = vector.broadcast %21 : vector<8x1xf32> to vector<8x384xf32>
    %23 = arith.mulf %16, %22 : vector<8x384xf32>
    %24 = arith.addf %14, %23 : vector<8x384xf32>
    %25 = vector.extract_strided_slice %3 {offsets = [0, 0], sizes = [8, 1], strides = [1, 1]} : vector<8x9xf32> to vector<8x1xf32>
    %26 = vector.broadcast %25 : vector<8x1xf32> to vector<8x384xf32>
    %27 = arith.mulf %16, %26 : vector<8x384xf32>
    %28 = arith.addf %15, %27 : vector<8x384xf32>
    %c18_i32 = arith.constant 18 : i32
    %29 = tpu.dynamic_rotate %12 by %c18_i32 dim 1 : vector<8x384xf32>, i32 -> vector<8x384xf32>
    %30 = vector.extract_strided_slice %1 {offsets = [0, 1], sizes = [8, 1], strides = [1, 1]} : vector<8x9xf32> to vector<8x1xf32>
    %31 = vector.broadcast %30 : vector<8x1xf32> to vector<8x384xf32>
    %32 = arith.mulf %29, %31 : vector<8x384xf32>
    %33 = arith.addf %20, %32 : vector<8x384xf32>
    %34 = vector.extract_strided_slice %2 {offsets = [0, 1], sizes = [8, 1], strides = [1, 1]} : vector<8x9xf32> to vector<8x1xf32>
    %35 = vector.broadcast %34 : vector<8x1xf32> to vector<8x384xf32>
    %36 = arith.mulf %29, %35 : vector<8x384xf32>
    %37 = arith.addf %24, %36 : vector<8x384xf32>
    %38 = vector.extract_strided_slice %3 {offsets = [0, 1], sizes = [8, 1], strides = [1, 1]} : vector<8x9xf32> to vector<8x1xf32>
    %39 = vector.broadcast %38 : vector<8x1xf32> to vector<8x384xf32>
    %40 = arith.mulf %29, %39 : vector<8x384xf32>
    %41 = arith.addf %28, %40 : vector<8x384xf32>
    %c17_i32 = arith.constant 17 : i32
    %42 = tpu.dynamic_rotate %12 by %c17_i32 dim 1 : vector<8x384xf32>, i32 -> vector<8x384xf32>
    %43 = vector.extract_strided_slice %1 {offsets = [0, 2], sizes = [8, 1], strides = [1, 1]} : vector<8x9xf32> to vector<8x1xf32>
    %44 = vector.broadcast %43 : vector<8x1xf32> to vector<8x384xf32>
    %45 = arith.mulf %42, %44 : vector<8x384xf32>
    %46 = arith.addf %33, %45 : vector<8x384xf32>
    %47 = vector.extract_strided_slice %2 {offsets = [0, 2], sizes = [8, 1], strides = [1, 1]} : vector<8x9xf32> to vector<8x1xf32>
    %48 = vector.broadcast %47 : vector<8x1xf32> to vector<8x384xf32>
    %49 = arith.mulf %42, %48 : vector<8x384xf32>
    %50 = arith.addf %37, %49 : vector<8x384xf32>
    %51 = vector.extract_strided_slice %3 {offsets = [0, 2], sizes = [8, 1], strides = [1, 1]} : vector<8x9xf32> to vector<8x1xf32>
    %52 = vector.broadcast %51 : vector<8x1xf32> to vector<8x384xf32>
    %53 = arith.mulf %42, %52 : vector<8x384xf32>
    %54 = arith.addf %41, %53 : vector<8x384xf32>
    %c1_i32 = arith.constant 1 : i32
    %55 = tpu.dynamic_rotate %12 by %c1_i32 dim 1 : vector<8x384xf32>, i32 -> vector<8x384xf32>
    %56 = vector.extract_strided_slice %1 {offsets = [0, 3], sizes = [8, 1], strides = [1, 1]} : vector<8x9xf32> to vector<8x1xf32>
    %57 = vector.broadcast %56 : vector<8x1xf32> to vector<8x384xf32>
    %58 = arith.mulf %55, %57 : vector<8x384xf32>
    %59 = arith.addf %46, %58 : vector<8x384xf32>
    %60 = vector.extract_strided_slice %2 {offsets = [0, 3], sizes = [8, 1], strides = [1, 1]} : vector<8x9xf32> to vector<8x1xf32>
    %61 = vector.broadcast %60 : vector<8x1xf32> to vector<8x384xf32>
    %62 = arith.mulf %55, %61 : vector<8x384xf32>
    %63 = arith.addf %50, %62 : vector<8x384xf32>
    %64 = vector.extract_strided_slice %3 {offsets = [0, 3], sizes = [8, 1], strides = [1, 1]} : vector<8x9xf32> to vector<8x1xf32>
    %65 = vector.broadcast %64 : vector<8x1xf32> to vector<8x384xf32>
    %66 = arith.mulf %55, %65 : vector<8x384xf32>
    %67 = arith.addf %54, %66 : vector<8x384xf32>
    %68 = vector.extract_strided_slice %1 {offsets = [0, 4], sizes = [8, 1], strides = [1, 1]} : vector<8x9xf32> to vector<8x1xf32>
    %69 = vector.broadcast %68 : vector<8x1xf32> to vector<8x384xf32>
    %70 = arith.mulf %12, %69 : vector<8x384xf32>
    %71 = arith.addf %59, %70 : vector<8x384xf32>
    %72 = vector.extract_strided_slice %2 {offsets = [0, 4], sizes = [8, 1], strides = [1, 1]} : vector<8x9xf32> to vector<8x1xf32>
    %73 = vector.broadcast %72 : vector<8x1xf32> to vector<8x384xf32>
    %74 = arith.mulf %12, %73 : vector<8x384xf32>
    %75 = arith.addf %63, %74 : vector<8x384xf32>
    %76 = vector.extract_strided_slice %3 {offsets = [0, 4], sizes = [8, 1], strides = [1, 1]} : vector<8x9xf32> to vector<8x1xf32>
    %77 = vector.broadcast %76 : vector<8x1xf32> to vector<8x384xf32>
    %78 = arith.mulf %12, %77 : vector<8x384xf32>
    %79 = arith.addf %67, %78 : vector<8x384xf32>
    %c383_i32 = arith.constant 383 : i32
    %80 = tpu.dynamic_rotate %12 by %c383_i32 dim 1 : vector<8x384xf32>, i32 -> vector<8x384xf32>
    %81 = vector.extract_strided_slice %1 {offsets = [0, 5], sizes = [8, 1], strides = [1, 1]} : vector<8x9xf32> to vector<8x1xf32>
    %82 = vector.broadcast %81 : vector<8x1xf32> to vector<8x384xf32>
    %83 = arith.mulf %80, %82 : vector<8x384xf32>
    %84 = arith.addf %71, %83 : vector<8x384xf32>
    %85 = vector.extract_strided_slice %2 {offsets = [0, 5], sizes = [8, 1], strides = [1, 1]} : vector<8x9xf32> to vector<8x1xf32>
    %86 = vector.broadcast %85 : vector<8x1xf32> to vector<8x384xf32>
    %87 = arith.mulf %80, %86 : vector<8x384xf32>
    %88 = arith.addf %75, %87 : vector<8x384xf32>
    %89 = vector.extract_strided_slice %3 {offsets = [0, 5], sizes = [8, 1], strides = [1, 1]} : vector<8x9xf32> to vector<8x1xf32>
    %90 = vector.broadcast %89 : vector<8x1xf32> to vector<8x384xf32>
    %91 = arith.mulf %80, %90 : vector<8x384xf32>
    %92 = arith.addf %79, %91 : vector<8x384xf32>
    %c367_i32 = arith.constant 367 : i32
    %93 = tpu.dynamic_rotate %12 by %c367_i32 dim 1 : vector<8x384xf32>, i32 -> vector<8x384xf32>
    %94 = vector.extract_strided_slice %1 {offsets = [0, 6], sizes = [8, 1], strides = [1, 1]} : vector<8x9xf32> to vector<8x1xf32>
    %95 = vector.broadcast %94 : vector<8x1xf32> to vector<8x384xf32>
    %96 = arith.mulf %93, %95 : vector<8x384xf32>
    %97 = arith.addf %84, %96 : vector<8x384xf32>
    %98 = vector.extract_strided_slice %2 {offsets = [0, 6], sizes = [8, 1], strides = [1, 1]} : vector<8x9xf32> to vector<8x1xf32>
    %99 = vector.broadcast %98 : vector<8x1xf32> to vector<8x384xf32>
    %100 = arith.mulf %93, %99 : vector<8x384xf32>
    %101 = arith.addf %88, %100 : vector<8x384xf32>
    %102 = vector.extract_strided_slice %3 {offsets = [0, 6], sizes = [8, 1], strides = [1, 1]} : vector<8x9xf32> to vector<8x1xf32>
    %103 = vector.broadcast %102 : vector<8x1xf32> to vector<8x384xf32>
    %104 = arith.mulf %93, %103 : vector<8x384xf32>
    %105 = arith.addf %92, %104 : vector<8x384xf32>
    %c366_i32 = arith.constant 366 : i32
    %106 = tpu.dynamic_rotate %12 by %c366_i32 dim 1 : vector<8x384xf32>, i32 -> vector<8x384xf32>
    %107 = vector.extract_strided_slice %1 {offsets = [0, 7], sizes = [8, 1], strides = [1, 1]} : vector<8x9xf32> to vector<8x1xf32>
    %108 = vector.broadcast %107 : vector<8x1xf32> to vector<8x384xf32>
    %109 = arith.mulf %106, %108 : vector<8x384xf32>
    %110 = arith.addf %97, %109 : vector<8x384xf32>
    %111 = vector.extract_strided_slice %2 {offsets = [0, 7], sizes = [8, 1], strides = [1, 1]} : vector<8x9xf32> to vector<8x1xf32>
    %112 = vector.broadcast %111 : vector<8x1xf32> to vector<8x384xf32>
    %113 = arith.mulf %106, %112 : vector<8x384xf32>
    %114 = arith.addf %101, %113 : vector<8x384xf32>
    %115 = vector.extract_strided_slice %3 {offsets = [0, 7], sizes = [8, 1], strides = [1, 1]} : vector<8x9xf32> to vector<8x1xf32>
    %116 = vector.broadcast %115 : vector<8x1xf32> to vector<8x384xf32>
    %117 = arith.mulf %106, %116 : vector<8x384xf32>
    %118 = arith.addf %105, %117 : vector<8x384xf32>
    %c365_i32 = arith.constant 365 : i32
    %119 = tpu.dynamic_rotate %12 by %c365_i32 dim 1 : vector<8x384xf32>, i32 -> vector<8x384xf32>
    %120 = vector.extract_strided_slice %1 {offsets = [0, 8], sizes = [8, 1], strides = [1, 1]} : vector<8x9xf32> to vector<8x1xf32>
    %121 = vector.broadcast %120 : vector<8x1xf32> to vector<8x384xf32>
    %122 = arith.mulf %119, %121 : vector<8x384xf32>
    %123 = arith.addf %110, %122 : vector<8x384xf32>
    %124 = vector.extract_strided_slice %2 {offsets = [0, 8], sizes = [8, 1], strides = [1, 1]} : vector<8x9xf32> to vector<8x1xf32>
    %125 = vector.broadcast %124 : vector<8x1xf32> to vector<8x384xf32>
    %126 = arith.mulf %119, %125 : vector<8x384xf32>
    %127 = arith.addf %114, %126 : vector<8x384xf32>
    %128 = vector.extract_strided_slice %3 {offsets = [0, 8], sizes = [8, 1], strides = [1, 1]} : vector<8x9xf32> to vector<8x1xf32>
    %129 = vector.broadcast %128 : vector<8x1xf32> to vector<8x384xf32>
    %130 = arith.mulf %119, %129 : vector<8x384xf32>
    %131 = arith.addf %118, %130 : vector<8x384xf32>
    %132 = vector.broadcast %4 : vector<8x1xf32> to vector<8x384xf32>
    %133 = arith.addf %123, %132 : vector<8x384xf32>
    %134 = vector.broadcast %5 : vector<8x1xf32> to vector<8x384xf32>
    %135 = arith.addf %127, %134 : vector<8x384xf32>
    %136 = vector.broadcast %11 : vector<1x384xf32> to vector<8x384xf32>
    %137 = arith.mulf %135, %136 : vector<8x384xf32>
    %138 = vector.broadcast %6 : vector<8x1xf32> to vector<8x384xf32>
    %139 = arith.addf %131, %138 : vector<8x384xf32>
    %cst_11 = arith.constant dense<0.000000e+00> : vector<8x8xf32>
    %140 = tpu.matmul %133, %137, %cst_11 {dimension_numbers = #tpu.dot_dimension_numbers<[1], [1], [0], [0], [0, 0, 1, 0], [], []>} : vector<8x384xf32>, vector<8x384xf32>, vector<8x8xf32> -> vector<8x8xf32>
    %141 = arith.addf %140, %10 : vector<8x8xf32>
    %cst_12 = arith.constant dense<0xFF800000> : vector<8xf32>
    %142 = vector.multi_reduction <maximumf>, %141, %cst_12 [1] : vector<8x8xf32> to vector<8xf32>
    %143 = vector.shape_cast %142 : vector<8xf32> to vector<8x1xf32>
    %144 = vector.broadcast %143 : vector<8x1xf32> to vector<8x8xf32>
    %145 = arith.subf %141, %144 : vector<8x8xf32>
    %146 = math.exp %145 : vector<8x8xf32>
    %cst_13 = arith.constant dense<0.000000e+00> : vector<8xf32>
    %147 = vector.multi_reduction <add>, %146, %cst_13 [1] : vector<8x8xf32> to vector<8xf32>
    %148 = vector.shape_cast %147 : vector<8xf32> to vector<8x1xf32>
    %149 = tpu.reciprocal %148 : vector<8x1xf32> -> vector<8x1xf32>
    %150 = vector.broadcast %149 : vector<8x1xf32> to vector<8x8xf32>
    %151 = arith.mulf %146, %150 : vector<8x8xf32>
    %cst_14 = arith.constant dense<0.000000e+00> : vector<8x8xf32>
    %152 = tpu.matmul %9, %151, %cst_14 {dimension_numbers = #tpu.dot_dimension_numbers<[1], [0], [0], [1], [0, 0, 1, 1], [], []>} : vector<8x8xf32>, vector<8x8xf32>, vector<8x8xf32> -> vector<8x8xf32>
    %cst_15 = arith.constant dense<0.000000e+00> : vector<8x384xf32>
    %153 = tpu.matmul %152, %139, %cst_15 {dimension_numbers = #tpu.dot_dimension_numbers<[1], [0], [0], [1], [0, 0, 1, 1], [], []>} : vector<8x8xf32>, vector<8x384xf32>, vector<8x384xf32> -> vector<8x384xf32>
    %154 = vector.broadcast %7 : vector<8x1xf32> to vector<8x384xf32>
    %155 = arith.mulf %153, %154 : vector<8x384xf32>
    %156 = vector.broadcast %8 : vector<8x1xf32> to vector<8x384xf32>
    %157 = arith.addf %155, %156 : vector<8x384xf32>
    %c0_16 = arith.constant 0 : index
    %c0_17 = arith.constant 0 : index
    %158 = vector.load %arg6[%c0_16, %c0_17] : memref<8x384xf32, #tpu.memory_space<vmem>>, vector<8x384xf32>
    tpu.vector_store %arg6[%c0_16, %c0_17], %157 {strides = array<i32>} : memref<8x384xf32, #tpu.memory_space<vmem>>, vector<8x384xf32>,
    return
  }
  func.func @transform_0(%arg0: i32) -> (i32, i32) {
    %c0_i32 = arith.constant 0 : i32
    %c0_i32_0 = arith.constant 0 : i32
    return %arg0, %c0_i32 : i32, i32
  }
  func.func @transform_1(%arg0: i32) -> (i32, i32) {
    %c0_i32 = arith.constant 0 : i32
    %c0_i32_0 = arith.constant 0 : i32
    %c0_i32_1 = arith.constant 0 : i32
    return %c0_i32, %c0_i32_0 : i32, i32
  }
  func.func @transform_2(%arg0: i32) -> (i32, i32) {
    %c0_i32 = arith.constant 0 : i32
    %c0_i32_0 = arith.constant 0 : i32
    %c0_i32_1 = arith.constant 0 : i32
    return %c0_i32, %c0_i32_0 : i32, i32
  }
  func.func @transform_3(%arg0: i32) -> (i32, i32) {
    %c0_i32 = arith.constant 0 : i32
    %c0_i32_0 = arith.constant 0 : i32
    %c0_i32_1 = arith.constant 0 : i32
    return %c0_i32, %c0_i32_0 : i32, i32
  }
  func.func @transform_4(%arg0: i32) -> (i32, i32) {
    %c0_i32 = arith.constant 0 : i32
    %c0_i32_0 = arith.constant 0 : i32
    %c0_i32_1 = arith.constant 0 : i32
    return %c0_i32, %c0_i32_0 : i32, i32
  }
  func.func @transform_5(%arg0: i32) -> (i32, i32) {
    %c0_i32 = arith.constant 0 : i32
    %c0_i32_0 = arith.constant 0 : i32
    return %arg0, %c0_i32 : i32, i32
  }
}

</mosaic_0001>

<llo_original>
// kernel: tpu_custom_call.1
$region0: #{tpu_custom_call.1}
  #allocation0 [shape = 'u32[]', space=smem, size = 0x4, offset = 0x4, fixed_abs, tag = 'smem constant byte address 0x4 - core index']
  #allocation1 [shape = 'u32[144,128]{1,0:T(1,128)}', space=vmem, size = 0x12000, scoped, tag = 'internal scratch']
  %s0 = inlined_call_operand.hbm [shape: f32[16,384], index: 0, kind: input, shape index: {}]
  %s1 = inlined_call_operand.hbm [shape: f32[8,32], index: 1, kind: input, shape index: {}]
  %s2 = inlined_call_operand.hbm [shape: f32[8,8], index: 2, kind: input, shape index: {}]
  %s3 = inlined_call_operand.vmem [shape: f32[8,8], index: 3, kind: input, shape index: {}]
  %s4 = inlined_call_operand.vmem [shape: f32[1,384], index: 4, kind: input, shape index: {}]
  %s5 = inlined_call_operand.hbm [shape: f32[16,384], index: 5, kind: output, shape index: {}]
  %s6 = sld [smem:[#allocation0]]
  $region65: #{tpu_custom_call.1} parent=0
    _
  %s8 = ssub.s32 1, %s6
  %s9 = scalar_select 0, %s8, %s6
  $region1: #{tpu_custom_call.1} parent=0
    #allocation2 [shape = 'u8[24576]{0}', space=vmem, size = 0x6000, scoped, tag = 'input window, operand 0']
    #allocation3 [shape = 's32[2]{0}', space=sflag, size = 0x8, scoped, tag = 'scoped memory for tpu_custom_call.1']
    #allocation4 [shape = 's32[2]{0}', space=sflag, size = 0x8, scoped, tag = 'scoped memory for tpu_custom_call.1']
    #allocation5 [shape = 'u8[4096]{0}', space=vmem, size = 0x1000, scoped, tag = 'input window, operand 1, single buffered']
    #allocation6 [shape = 's32[1]{0}', space=sflag, size = 0x4, scoped, tag = 'scoped memory for tpu_custom_call.1']
    #allocation7 [shape = 'u8[4096]{0}', space=vmem, size = 0x1000, scoped, tag = 'input window, operand 2, single buffered']
    #allocation8 [shape = 'u8[24576]{0}', space=vmem, size = 0x6000, scoped, tag = 'output window, operand 0']
    %10 = vsyncpa [#allocation3], 0
    %s11 = scalar_lea.sflag [#allocation3], 1
    %12 = vsyncpa %s11, 0
    %13 = vsyncpa [#allocation6], 0
    %14 = vsyncpa [#allocation4], 0
    %s15 = scalar_lea.sflag [#allocation4], 1
    %16 = vsyncpa %s15, 0
    loop: start=0, step=1, limit=4
    $region2: #{tpu_custom_call.1} parent=1 // loop_pre_header
      _
    $region3: #{tpu_custom_call.1} parent=1 // loop_header
      %s18 = sphi 0, %s22
      %p19 = scmp.ge.s32.totalorder %s18, 4
      %s28 = sphi 0, %s30
      %s31 = sphi 0, %s28
      %s32 = sphi 0, %s31
      %s48 = sphi 0, %s32
      %s52 = sphi 0, %s52
      %s54 = sphi 0, %s52
      %s55 = sphi 0, %s54
      %s69 = sphi 0, %s55
      %s73 = sphi 0, %s73
      %s75 = sphi 0, %s73
      %s76 = sphi 0, %s75
      %s90 = sphi 0, %s76
      %s94 = sphi 0, %s94
      %s96 = sphi 0, %s94
      %s97 = sphi 0, %s96
      %s111 = sphi 0, %s97
      %s115 = sphi 0, %s115
      %s117 = sphi 0, %s115
      %s118 = sphi 0, %s117
      %s132 = sphi 0, %s118
      %s138 = sphi 0, %s140
      %s141 = sphi 0, %s138
      %s142 = sphi 0, %s141
      %s158 = sphi 0, %s142
    $region4: #{tpu_custom_call.1} parent=1 // loop_header_branch
      %21 = sbr.rel (%p19) target = $region8
    $region5: #{tpu_custom_call.1} parent=1 // loop_body
      %s23 = ssub.s32 %s18, 1
      %s24 = ssub.s32 %s18, 2
      %s25 = sadd.s32 %s18, 1
      %s26 = ssub.s32 %s18, %s25
      %p27 = scmp.eq.s32.totalorder %s26, 0
      %s29 = sadd.s32 %s28, 1
      %s30 = scalar_select %p27, %s28, %s29
      %p33 = pneg %p27
      %p34 = scmp.eq.s32.totalorder %s18, 1
      %p35 = por %p33, %p34
      %p36 = scmp.ne.s32.totalorder %s28, %s31
      %p37 = scmp.eq.s32.totalorder %s18, 0
      %p38 = por %p36, %p37
      %p39 = scmp.ne.s32.totalorder %s28, %s31
      %p40 = scmp.eq.s32.totalorder %s23, 1
      %p41 = por %p39, %p40
      %p42 = scmp.ne.s32.totalorder %s31, %s32
      %p43 = scmp.eq.s32.totalorder %s23, 0
      %p44 = por %p42, %p43
      %p45 = scmp.ne.s32.totalorder %s31, %s32
      %p46 = scmp.eq.s32.totalorder %s24, 1
      %p47 = por %p45, %p46
      %p49 = scmp.ne.s32.totalorder %s32, %s48
      %p50 = scmp.eq.s32.totalorder %s24, 0
      %p51 = por %p49, %p50
      %s53 = sadd.s32 %s52, 1
      %p56 = scmp.eq.s32.totalorder %s18, 1
      %p57 = scmp.ne.s32.totalorder %s52, %s54
      %p58 = scmp.eq.s32.totalorder %s18, 0
      %p59 = por %p57, %p58
      %p60 = scmp.ne.s32.totalorder %s52, %s54
      %p61 = scmp.eq.s32.totalorder %s23, 1
      %p62 = por %p60, %p61
      %p63 = scmp.ne.s32.totalorder %s54, %s55
      %p64 = scmp.eq.s32.totalorder %s23, 0
      %p65 = por %p63, %p64
      %p66 = scmp.ne.s32.totalorder %s54, %s55
      %p67 = scmp.eq.s32.totalorder %s24, 1
      %p68 = por %p66, %p67
      %p70 = scmp.ne.s32.totalorder %s55, %s69
      %p71 = scmp.eq.s32.totalorder %s24, 0
      %p72 = por %p70, %p71
      %s74 = sadd.s32 %s73, 1
      %p77 = scmp.eq.s32.totalorder %s18, 1
      %p78 = scmp.ne.s32.totalorder %s73, %s75
      %p79 = scmp.eq.s32.totalorder %s18, 0
      %p80 = por %p78, %p79
      %p81 = scmp.ne.s32.totalorder %s73, %s75
      %p82 = scmp.eq.s32.totalorder %s23, 1
      %p83 = por %p81, %p82
      %p84 = scmp.ne.s32.totalorder %s75, %s76
      %p85 = scmp.eq.s32.totalorder %s23, 0
      %p86 = por %p84, %p85
      %p87 = scmp.ne.s32.totalorder %s75, %s76
      %p88 = scmp.eq.s32.totalorder %s24, 1
      %p89 = por %p87, %p88
      %p91 = scmp.ne.s32.totalorder %s76, %s90
      %p92 = scmp.eq.s32.totalorder %s24, 0
      %p93 = por %p91, %p92
      %s95 = sadd.s32 %s94, 1
      %p98 = scmp.eq.s32.totalorder %s18, 1
      %p99 = scmp.ne.s32.totalorder %s94, %s96
      %p100 = scmp.eq.s32.totalorder %s18, 0
      %p101 = por %p99, %p100
      %p102 = scmp.ne.s32.totalorder %s94, %s96
      %p103 = scmp.eq.s32.totalorder %s23, 1
      %p104 = por %p102, %p103
      %p105 = scmp.ne.s32.totalorder %s96, %s97
      %p106 = scmp.eq.s32.totalorder %s23, 0
      %p107 = por %p105, %p106
      %p108 = scmp.ne.s32.totalorder %s96, %s97
      %p109 = scmp.eq.s32.totalorder %s24, 1
      %p110 = por %p108, %p109
      %p112 = scmp.ne.s32.totalorder %s97, %s111
      %p113 = scmp.eq.s32.totalorder %s24, 0
      %p114 = por %p112, %p113
      %s116 = sadd.s32 %s115, 1
      %p119 = scmp.eq.s32.totalorder %s18, 1
      %p120 = scmp.ne.s32.totalorder %s115, %s117
      %p121 = scmp.eq.s32.totalorder %s18, 0
      %p122 = por %p120, %p121
      %p123 = scmp.ne.s32.totalorder %s115, %s117
      %p124 = scmp.eq.s32.totalorder %s23, 1
      %p125 = por %p123, %p124
      %p126 = scmp.ne.s32.totalorder %s117, %s118
      %p127 = scmp.eq.s32.totalorder %s23, 0
      %p128 = por %p126, %p127
      %p129 = scmp.ne.s32.totalorder %s117, %s118
      %p130 = scmp.eq.s32.totalorder %s24, 1
      %p131 = por %p129, %p130
      %p133 = scmp.ne.s32.totalorder %s118, %s132
      %p134 = scmp.eq.s32.totalorder %s24, 0
      %p135 = por %p133, %p134
      %s136 = ssub.s32 %s18, %s25
      %p137 = scmp.eq.s32.totalorder %s136, 0
      %s139 = sadd.s32 %s138, 1
      %s140 = scalar_select %p137, %s138, %s139
      %p143 = pneg %p137
      %p144 = scmp.eq.s32.totalorder %s18, 1
      %p145 = por %p143, %p144
      %p146 = scmp.ne.s32.totalorder %s138, %s141
      %p147 = scmp.eq.s32.totalorder %s18, 0
      %p148 = por %p146, %p147
      %p149 = scmp.ne.s32.totalorder %s138, %s141
      %p150 = scmp.eq.s32.totalorder %s23, 1
      %p151 = por %p149, %p150
      %p152 = scmp.ne.s32.totalorder %s141, %s142
      %p153 = scmp.eq.s32.totalorder %s23, 0
      %p154 = por %p152, %p153
      %p155 = scmp.ne.s32.totalorder %s141, %s142
      %p156 = scmp.eq.s32.totalorder %s24, 1
      %p157 = por %p155, %p156
      %p159 = scmp.ne.s32.totalorder %s142, %s158
      %p160 = scmp.eq.s32.totalorder %s24, 0
      %p161 = por %p159, %p160
      %p162 = scmp.le.s32.totalorder 1, %s18
      %p163 = scmp.lt.s32.totalorder %s18, 3
      %p164 = pnand %p162, %p163
      %p165 = pneg %p164
      // Predicated region
      $region9: #{tpu_custom_call.1} parent=5 // pred_check
        _
      $region10: #{tpu_custom_call.1} parent=5 // pred_check_branch
        %167 = sbr.rel (%p164) target = $region12
      $region11: #{tpu_custom_call.1} parent=5 // pred_region
        %s168 = ssub.s32 %s18, 1
        // Predicated region
        $region13: #{tpu_custom_call.1} parent=11 // pred_check
          %p169 = pneg %p65
        $region14: #{tpu_custom_call.1} parent=11 // pred_check_branch
          %171 = sbr.rel (%p169) target = $region16
        $region15: #{tpu_custom_call.1} parent=11 // pred_region
          %s173 = ssub.s32 128, 128
          %174 = vsyncadd [#allocation6], %s173
          %s176 = sshll.u32 [#allocation5], 4
          %s177 = int_to_ptr.vmem [resolvable:$true] %s176
          %179 = dma.hbm_to_vmem [thread:$0]  %s1, 128, %s177, [#allocation6]
        $region16: #{tpu_custom_call.1} parent=11 // pred_fallthru
          _
        // Predicated region
        $region17: #{tpu_custom_call.1} parent=11 // pred_check
          %p180 = pneg %p86
        $region18: #{tpu_custom_call.1} parent=11 // pred_check_branch
          %182 = sbr.rel (%p180) target = $region20
        $region19: #{tpu_custom_call.1} parent=11 // pred_region
          %s184 = ssub.s32 128, 128
          %185 = vsyncadd [#allocation6], %s184
          %s187 = sshll.u32 [#allocation7], 4
          %s188 = int_to_ptr.vmem [resolvable:$true] %s187
          %190 = dma.hbm_to_vmem [thread:$0]  %s2, 128, %s188, [#allocation6]
        $region20: #{tpu_custom_call.1} parent=11 // pred_fallthru
          _
        // Predicated region
        $region21: #{tpu_custom_call.1} parent=11 // pred_check
          %p191 = pneg %p107
        $region22: #{tpu_custom_call.1} parent=11 // pred_check_branch
          %193 = sbr.rel (%p191) target = $region24
        $region23: #{tpu_custom_call.1} parent=11 // pred_region
          _
        $region24: #{tpu_custom_call.1} parent=11 // pred_fallthru
          _
        // Predicated region
        $region25: #{tpu_custom_call.1} parent=11 // pred_check
          %p194 = pneg %p128
        $region26: #{tpu_custom_call.1} parent=11 // pred_check_branch
          %196 = sbr.rel (%p194) target = $region28
        $region27: #{tpu_custom_call.1} parent=11 // pred_region
          _
        $region28: #{tpu_custom_call.1} parent=11 // pred_fallthru
          _
      $region12: #{tpu_custom_call.1} parent=5 // pred_fallthru
        _
      %p197 = scmp.lt.s32.totalorder %s18, 2
      // Predicated region
      $region29: #{tpu_custom_call.1} parent=5 // pred_check
        %p198 = pneg %p197
      $region30: #{tpu_custom_call.1} parent=5 // pred_check_branch
        %200 = sbr.rel (%p198) target = $region32
      $region31: #{tpu_custom_call.1} parent=5 // pred_region
        // Predicated region
        $region33: #{tpu_custom_call.1} parent=31 // pred_check
          %p201 = pneg %p38
        $region34: #{tpu_custom_call.1} parent=31 // pred_check_branch
          %203 = sbr.rel (%p201) target = $region36
        $region35: #{tpu_custom_call.1} parent=31 // pred_region
          %s204 = sand.u32 %s28, 1
          %s205 = scalar_lea.sflag [#allocation3], %s204
          %s206 = sand.u32 %s28, 1
          %s207 = smul.addr %s206, 24
          %s208 = scalar_lea.vmem [#allocation2], %s207
          %s210 = ssub.s32 384, 384
          %211 = vsyncadd %s205, %s210
          %s212 = smul.addr %s18, 3
          %s213 = smul.addr %s212, 128
          %s214 = scalar_lea.hbm %s0, %s213
          %s216 = sshll.u32 %s208, 4
          %s217 = int_to_ptr.vmem [resolvable:$true] %s216
          %219 = dma.hbm_to_vmem [thread:$0]  %s214, 384, %s217, %s205
        $region36: #{tpu_custom_call.1} parent=31 // pred_fallthru
          _
      $region32: #{tpu_custom_call.1} parent=5 // pred_fallthru
        _
      %p220 = scmp.le.s32.totalorder 1, %s18
      %p221 = scmp.lt.s32.totalorder %s18, 3
      %p222 = pnand %p220, %p221
      %p223 = pneg %p222
      // Predicated region
      $region37: #{tpu_custom_call.1} parent=5 // pred_check
        _
      $region38: #{tpu_custom_call.1} parent=5 // pred_check_branch
        %225 = sbr.rel (%p222) target = $region40
      $region39: #{tpu_custom_call.1} parent=5 // pred_region
        %s226 = ssub.s32 %s18, 1
        %s227 = sand.u32 %s31, 1
        %s228 = scalar_lea.sflag [#allocation3], %s227
        %s229 = sand.u32 %s31, 1
        %s230 = smul.addr %s229, 24
        %s231 = scalar_lea.vmem [#allocation2], %s230
        // Predicated region
        $region41: #{tpu_custom_call.1} parent=39 // pred_check
          %p232 = pneg %p44
        $region42: #{tpu_custom_call.1} parent=39 // pred_check_branch
          %234 = sbr.rel (%p232) target = $region44
        $region43: #{tpu_custom_call.1} parent=39 // pred_region
          %235 = dma.done %s228, 384
        $region44: #{tpu_custom_call.1} parent=39 // pred_fallthru
          _
        // Predicated region
        $region45: #{tpu_custom_call.1} parent=39 // pred_check
          %p236 = pneg %p65
        $region46: #{tpu_custom_call.1} parent=39 // pred_check_branch
          %238 = sbr.rel (%p236) target = $region48
        $region47: #{tpu_custom_call.1} parent=39 // pred_region
          %239 = dma.done [#allocation6], 128
        $region48: #{tpu_custom_call.1} parent=39 // pred_fallthru
          _
        // Predicated region
        $region49: #{tpu_custom_call.1} parent=39 // pred_check
          %p240 = pneg %p86
        $region50: #{tpu_custom_call.1} parent=39 // pred_check_branch
          %242 = sbr.rel (%p240) target = $region52
        $region51: #{tpu_custom_call.1} parent=39 // pred_region
          %243 = dma.done [#allocation6], 128
        $region52: #{tpu_custom_call.1} parent=39 // pred_fallthru
          _
        %s244 = sand.u32 %s31, 1
        %s245 = scalar_lea.sflag [#allocation3], %s244
        %s246 = sand.u32 %s31, 1
        %s247 = smul.addr %s246, 24
        %s248 = scalar_lea.vmem [#allocation2], %s247
        %p249 = pneg %p44
        %p250 = pneg %p41
        %p251 = pneg %p65
        %p252 = pneg %p62
        %p253 = pneg %p86
        %p254 = pneg %p83
        %p255 = pneg %p107
        %p256 = pneg %p104
        %p257 = pneg %p128
        %p258 = pneg %p125
        %p259 = pneg %p154
        %p260 = pneg %p151
        %s261 = sand.u32 %s141, 1
        %s262 = scalar_lea.sflag [#allocation4], %s261
        %s263 = sand.u32 %s141, 1
        %s264 = smul.addr %s263, 24
        %s265 = scalar_lea.vmem [#allocation8], %s264
        %v266 = vld [vmem:[#allocation5] sm:$0xff]
        %v267 = vld [vmem:[#allocation7] sm:$0xff]
        %v268 = vld [vmem:[%s3] sm:$0xff]
        %v269 = vld [vmem:[%s4] sm:$0x7]
        %v270 = vld [vmem:[%s231] sm:$0xff]
        %v271 = vld [vmem:[%s231 + $0x8] sm:$0xff]
        %v272 = vld [vmem:[%s231 + $0x10] sm:$0xff]
        %273 = vrot.lane.b32.xlu0 %v270, 19
        %v274 = vpop.permute.xlu0 %273
        %275 = vrot.lane.b32.xlu0 %v271, 19
        %v276 = vpop.permute.xlu0 %275
        %277 = vrot.lane.b32.xlu0 %v272, 19
        %v278 = vpop.permute.xlu0 %277
        %v279 = vlaneseq
        %v280 = vand.u32 %v279, 127
        %vm281 = vcmp.lt.s32.totalorder %v280, 19
        %v282 = vsel %vm281, %v276, %v278
        %v283 = vsel %vm281, %v274, %v276
        %v284 = vsel %vm281, %v278, %v274
        %286 = vset.pattern.permute.xlu0 0
        %287 = vperm.xlu0 %286, %v266
        %v288 = vpop.permute.xlu0 %287
        %v290 = vmul.f32 %v284, %v288
        %v291 = vmul.f32 %v283, %v288
        %v292 = vmul.f32 %v282, %v288
        %v293 = vadd.f32 %v290, 0.0
        %v294 = vadd.f32 %v291, 0.0
        %v295 = vadd.f32 %v292, 0.0
        %296 = vset.pattern.permute.xlu0 9
        %297 = vperm.xlu0 %296, %v266
        %v298 = vpop.permute.xlu0 %297
        %v300 = vmul.f32 %v284, %v298
        %v301 = vmul.f32 %v283, %v298
        %v302 = vmul.f32 %v282, %v298
        %v303 = vadd.f32 %v300, 0.0
        %v304 = vadd.f32 %v301, 0.0
        %v305 = vadd.f32 %v302, 0.0
        %306 = vset.pattern.permute.xlu0 18
        %307 = vperm.xlu0 %306, %v266
        %v308 = vpop.permute.xlu0 %307
        %v310 = vmul.f32 %v284, %v308
        %v311 = vmul.f32 %v283, %v308
        %v312 = vmul.f32 %v282, %v308
        %v313 = vadd.f32 %v310, 0.0
        %v314 = vadd.f32 %v311, 0.0
        %v315 = vadd.f32 %v312, 0.0
        %316 = vrot.lane.b32.xlu0 %v270, 18
        %v317 = vpop.permute.xlu0 %316
        %318 = vrot.lane.b32.xlu0 %v271, 18
        %v319 = vpop.permute.xlu0 %318
        %320 = vrot.lane.b32.xlu0 %v272, 18
        %v321 = vpop.permute.xlu0 %320
        %vm322 = vcmp.lt.s32.totalorder %v280, 18
        %v323 = vsel %vm322, %v319, %v321
        %v324 = vsel %vm322, %v317, %v319
        %v325 = vsel %vm322, %v321, %v317
        %326 = vset.pattern.permute.xlu0 1
        %327 = vperm.xlu0 %326, %v266
        %v328 = vpop.permute.xlu0 %327
        %v330 = vmul.f32 %v325, %v328
        %v331 = vmul.f32 %v324, %v328
        %v332 = vmul.f32 %v323, %v328
        %v333 = vadd.f32 %v293, %v330
        %v334 = vadd.f32 %v294, %v331
        %v335 = vadd.f32 %v295, %v332
        %336 = vset.pattern.permute.xlu0 10
        %337 = vperm.xlu0 %336, %v266
        %v338 = vpop.permute.xlu0 %337
        %v340 = vmul.f32 %v325, %v338
        %v341 = vmul.f32 %v324, %v338
        %v342 = vmul.f32 %v323, %v338
        %v343 = vadd.f32 %v303, %v340
        %v344 = vadd.f32 %v304, %v341
        %v345 = vadd.f32 %v305, %v342
        %346 = vset.pattern.permute.xlu0 19
        %347 = vperm.xlu0 %346, %v266
        %v348 = vpop.permute.xlu0 %347
        %v350 = vmul.f32 %v325, %v348
        %v351 = vmul.f32 %v324, %v348
        %v352 = vmul.f32 %v323, %v348
        %v353 = vadd.f32 %v313, %v350
        %v354 = vadd.f32 %v314, %v351
        %v355 = vadd.f32 %v315, %v352
        %356 = vrot.lane.b32.xlu0 %v270, 17
        %v357 = vpop.permute.xlu0 %356
        %358 = vrot.lane.b32.xlu0 %v271, 17
        %v359 = vpop.permute.xlu0 %358
        %360 = vrot.lane.b32.xlu0 %v272, 17
        %v361 = vpop.permute.xlu0 %360
        %vm362 = vcmp.lt.s32.totalorder %v280, 17
        %v363 = vsel %vm362, %v359, %v361
        %v364 = vsel %vm362, %v357, %v359
        %v365 = vsel %vm362, %v361, %v357
        %366 = vset.pattern.permute.xlu0 2
        %367 = vperm.xlu0 %366, %v266
        %v368 = vpop.permute.xlu0 %367
        %v370 = vmul.f32 %v365, %v368
        %v371 = vmul.f32 %v364, %v368
        %v372 = vmul.f32 %v363, %v368
        %v373 = vadd.f32 %v333, %v370
        %v374 = vadd.f32 %v334, %v371
        %v375 = vadd.f32 %v335, %v372
        %376 = vset.pattern.permute.xlu0 11
        %377 = vperm.xlu0 %376, %v266
        %v378 = vpop.permute.xlu0 %377
        %v380 = vmul.f32 %v365, %v378
        %v381 = vmul.f32 %v364, %v378
        %v382 = vmul.f32 %v363, %v378
        %v383 = vadd.f32 %v343, %v380
        %v384 = vadd.f32 %v344, %v381
        %v385 = vadd.f32 %v345, %v382
        %386 = vset.pattern.permute.xlu0 20
        %387 = vperm.xlu0 %386, %v266
        %v388 = vpop.permute.xlu0 %387
        %v390 = vmul.f32 %v365, %v388
        %v391 = vmul.f32 %v364, %v388
        %v392 = vmul.f32 %v363, %v388
        %v393 = vadd.f32 %v353, %v390
        %v394 = vadd.f32 %v354, %v391
        %v395 = vadd.f32 %v355, %v392
        %396 = vrot.lane.b32.xlu0 %v270, 1
        %v397 = vpop.permute.xlu0 %396
        %398 = vrot.lane.b32.xlu0 %v271, 1
        %v399 = vpop.permute.xlu0 %398
        %400 = vrot.lane.b32.xlu0 %v272, 1
        %v401 = vpop.permute.xlu0 %400
        %vm402 = vcmp.lt.s32.totalorder %v280, 1
        %v403 = vsel %vm402, %v399, %v401
        %v404 = vsel %vm402, %v397, %v399
        %v405 = vsel %vm402, %v401, %v397
        %406 = vset.pattern.permute.xlu0 3
        %407 = vperm.xlu0 %406, %v266
        %v408 = vpop.permute.xlu0 %407
        %v410 = vmul.f32 %v405, %v408
        %v411 = vmul.f32 %v404, %v408
        %v412 = vmul.f32 %v403, %v408
        %v413 = vadd.f32 %v373, %v410
        %v414 = vadd.f32 %v374, %v411
        %v415 = vadd.f32 %v375, %v412
        %416 = vset.pattern.permute.xlu0 12
        %417 = vperm.xlu0 %416, %v266
        %v418 = vpop.permute.xlu0 %417
        %v420 = vmul.f32 %v405, %v418
        %v421 = vmul.f32 %v404, %v418
        %v422 = vmul.f32 %v403, %v418
        %v423 = vadd.f32 %v383, %v420
        %v424 = vadd.f32 %v384, %v421
        %v425 = vadd.f32 %v385, %v422
        %426 = vset.pattern.permute.xlu0 21
        %427 = vperm.xlu0 %426, %v266
        %v428 = vpop.permute.xlu0 %427
        %v430 = vmul.f32 %v405, %v428
        %v431 = vmul.f32 %v404, %v428
        %v432 = vmul.f32 %v403, %v428
        %v433 = vadd.f32 %v393, %v430
        %v434 = vadd.f32 %v394, %v431
        %v435 = vadd.f32 %v395, %v432
        %436 = vset.pattern.permute.xlu0 4
        %437 = vperm.xlu0 %436, %v266
        %v438 = vpop.permute.xlu0 %437
        %v440 = vmul.f32 %v270, %v438
        %v441 = vmul.f32 %v271, %v438
        %v442 = vmul.f32 %v272, %v438
        %v443 = vadd.f32 %v413, %v440
        %v444 = vadd.f32 %v414, %v441
        %v445 = vadd.f32 %v415, %v442
        %446 = vset.pattern.permute.xlu0 13
        %447 = vperm.xlu0 %446, %v266
        %v448 = vpop.permute.xlu0 %447
        %v450 = vmul.f32 %v270, %v448
        %v451 = vmul.f32 %v271, %v448
        %v452 = vmul.f32 %v272, %v448
        %v453 = vadd.f32 %v423, %v450
        %v454 = vadd.f32 %v424, %v451
        %v455 = vadd.f32 %v425, %v452
        %456 = vset.pattern.permute.xlu0 22
        %457 = vperm.xlu0 %456, %v266
        %v458 = vpop.permute.xlu0 %457
        %v460 = vmul.f32 %v270, %v458
        %v461 = vmul.f32 %v271, %v458
        %v462 = vmul.f32 %v272, %v458
        %v463 = vadd.f32 %v433, %v460
        %v464 = vadd.f32 %v434, %v461
        %v465 = vadd.f32 %v435, %v462
        %466 = vrot.lane.b32.xlu0 %v270, 127
        %v467 = vpop.permute.xlu0 %466
        %468 = vrot.lane.b32.xlu0 %v271, 127
        %v469 = vpop.permute.xlu0 %468
        %470 = vrot.lane.b32.xlu0 %v272, 127
        %v471 = vpop.permute.xlu0 %470
        %vm472 = vcmp.lt.s32.totalorder %v280, 127
        %v473 = vsel %vm472, %v469, %v471
        %v474 = vsel %vm472, %v467, %v469
        %v475 = vsel %vm472, %v471, %v467
        %476 = vset.pattern.permute.xlu0 5
        %477 = vperm.xlu0 %476, %v266
        %v478 = vpop.permute.xlu0 %477
        %v480 = vmul.f32 %v474, %v478
        %v481 = vmul.f32 %v473, %v478
        %v482 = vmul.f32 %v475, %v478
        %v483 = vadd.f32 %v443, %v480
        %v484 = vadd.f32 %v444, %v481
        %v485 = vadd.f32 %v445, %v482
        %486 = vset.pattern.permute.xlu0 14
        %487 = vperm.xlu0 %486, %v266
        %v488 = vpop.permute.xlu0 %487
        %v490 = vmul.f32 %v474, %v488
        %v491 = vmul.f32 %v473, %v488
        %v492 = vmul.f32 %v475, %v488
        %v493 = vadd.f32 %v453, %v490
        %v494 = vadd.f32 %v454, %v491
        %v495 = vadd.f32 %v455, %v492
        %496 = vset.pattern.permute.xlu0 23
        %497 = vperm.xlu0 %496, %v266
        %v498 = vpop.permute.xlu0 %497
        %v500 = vmul.f32 %v474, %v498
        %v501 = vmul.f32 %v473, %v498
        %v502 = vmul.f32 %v475, %v498
        %v503 = vadd.f32 %v463, %v500
        %v504 = vadd.f32 %v464, %v501
        %v505 = vadd.f32 %v465, %v502
        %506 = vrot.lane.b32.xlu0 %v270, 111
        %v507 = vpop.permute.xlu0 %506
        %508 = vrot.lane.b32.xlu0 %v271, 111
        %v509 = vpop.permute.xlu0 %508
        %510 = vrot.lane.b32.xlu0 %v272, 111
        %v511 = vpop.permute.xlu0 %510
        %vm512 = vcmp.lt.s32.totalorder %v280, 111
        %v513 = vsel %vm512, %v509, %v511
        %v514 = vsel %vm512, %v507, %v509
        %v515 = vsel %vm512, %v511, %v507
        %516 = vset.pattern.permute.xlu0 6
        %517 = vperm.xlu0 %516, %v266
        %v518 = vpop.permute.xlu0 %517
        %v520 = vmul.f32 %v514, %v518
        %v521 = vmul.f32 %v513, %v518
        %v522 = vmul.f32 %v515, %v518
        %v523 = vadd.f32 %v483, %v520
        %v524 = vadd.f32 %v484, %v521
        %v525 = vadd.f32 %v485, %v522
        %526 = vset.pattern.permute.xlu0 15
        %527 = vperm.xlu0 %526, %v266
        %v528 = vpop.permute.xlu0 %527
        %v530 = vmul.f32 %v514, %v528
        %v531 = vmul.f32 %v513, %v528
        %v532 = vmul.f32 %v515, %v528
        %v533 = vadd.f32 %v493, %v530
        %v534 = vadd.f32 %v494, %v531
        %v535 = vadd.f32 %v495, %v532
        %536 = vset.pattern.permute.xlu0 24
        %537 = vperm.xlu0 %536, %v266
        %v538 = vpop.permute.xlu0 %537
        %v540 = vmul.f32 %v514, %v538
        %v541 = vmul.f32 %v513, %v538
        %v542 = vmul.f32 %v515, %v538
        %v543 = vadd.f32 %v503, %v540
        %v544 = vadd.f32 %v504, %v541
        %v545 = vadd.f32 %v505, %v542
        %546 = vrot.lane.b32.xlu0 %v270, 110
        %v547 = vpop.permute.xlu0 %546
        %548 = vrot.lane.b32.xlu0 %v271, 110
        %v549 = vpop.permute.xlu0 %548
        %550 = vrot.lane.b32.xlu0 %v272, 110
        %v551 = vpop.permute.xlu0 %550
        %vm552 = vcmp.lt.s32.totalorder %v280, 110
        %v553 = vsel %vm552, %v549, %v551
        %v554 = vsel %vm552, %v547, %v549
        %v555 = vsel %vm552, %v551, %v547
        %556 = vset.pattern.permute.xlu0 7
        %557 = vperm.xlu0 %556, %v266
        %v558 = vpop.permute.xlu0 %557
        %v560 = vmul.f32 %v554, %v558
        %v561 = vmul.f32 %v553, %v558
        %v562 = vmul.f32 %v555, %v558
        %v563 = vadd.f32 %v523, %v560
        %v564 = vadd.f32 %v524, %v561
        %v565 = vadd.f32 %v525, %v562
        %566 = vset.pattern.permute.xlu0 16
        %567 = vperm.xlu0 %566, %v266
        %v568 = vpop.permute.xlu0 %567
        %v570 = vmul.f32 %v554, %v568
        %v571 = vmul.f32 %v553, %v568
        %v572 = vmul.f32 %v555, %v568
        %v573 = vadd.f32 %v533, %v570
        %v574 = vadd.f32 %v534, %v571
        %v575 = vadd.f32 %v535, %v572
        %576 = vset.pattern.permute.xlu0 25
        %577 = vperm.xlu0 %576, %v266
        %v578 = vpop.permute.xlu0 %577
        %v580 = vmul.f32 %v554, %v578
        %v581 = vmul.f32 %v553, %v578
        %v582 = vmul.f32 %v555, %v578
        %v583 = vadd.f32 %v543, %v580
        %v584 = vadd.f32 %v544, %v581
        %v585 = vadd.f32 %v545, %v582
        %586 = vrot.lane.b32.xlu0 %v270, 109
        %v587 = vpop.permute.xlu0 %586
        %588 = vrot.lane.b32.xlu0 %v271, 109
        %v589 = vpop.permute.xlu0 %588
        %590 = vrot.lane.b32.xlu0 %v272, 109
        %v591 = vpop.permute.xlu0 %590
        %vm592 = vcmp.lt.s32.totalorder %v280, 109
        %v593 = vsel %vm592, %v589, %v591
        %v594 = vsel %vm592, %v587, %v589
        %v595 = vsel %vm592, %v591, %v587
        %596 = vset.pattern.permute.xlu0 8
        %597 = vperm.xlu0 %596, %v266
        %v598 = vpop.permute.xlu0 %597
        %v600 = vmul.f32 %v594, %v598
        %v601 = vmul.f32 %v593, %v598
        %v602 = vmul.f32 %v595, %v598
        %v603 = vadd.f32 %v563, %v600
        %v604 = vadd.f32 %v564, %v601
        %v605 = vadd.f32 %v565, %v602
        %606 = vset.pattern.permute.xlu0 17
        %607 = vperm.xlu0 %606, %v266
        %v608 = vpop.permute.xlu0 %607
        %v610 = vmul.f32 %v594, %v608
        %v611 = vmul.f32 %v593, %v608
        %v612 = vmul.f32 %v595, %v608
        %v613 = vadd.f32 %v573, %v610
        %v614 = vadd.f32 %v574, %v611
        %v615 = vadd.f32 %v575, %v612
        %616 = vset.pattern.permute.xlu0 26
        %617 = vperm.xlu0 %616, %v266
        %v618 = vpop.permute.xlu0 %617
        %v620 = vmul.f32 %v594, %v618
        %v621 = vmul.f32 %v593, %v618
        %v622 = vmul.f32 %v595, %v618
        %v623 = vadd.f32 %v583, %v620
        %v624 = vadd.f32 %v584, %v621
        %v625 = vadd.f32 %v585, %v622
        %626 = vset.pattern.permute.xlu0 27
        %627 = vperm.xlu0 %626, %v266
        %v628 = vpop.permute.xlu0 %627
        %v630 = vadd.f32 %v603, %v628
        %v631 = vadd.f32 %v604, %v628
        %v632 = vadd.f32 %v605, %v628
        %633 = vset.pattern.permute.xlu0 28
        %634 = vperm.xlu0 %633, %v266
        %v635 = vpop.permute.xlu0 %634
        %v637 = vadd.f32 %v613, %v635
        %v638 = vadd.f32 %v614, %v635
        %v639 = vadd.f32 %v615, %v635
        %v641 = vlaneseq
        %v642 = vshrl.u32 %v641, 7
        %v643 = vsub.s32 0, %v642
        %v644 = vrot.slane %v269, %v643
        %v645 = vlaneseq
        %v646 = vshrl.u32 %v645, 7
        %v647 = vsub.s32 1, %v646
        %v648 = vrot.slane %v269, %v647
        %v649 = vlaneseq
        %v650 = vshrl.u32 %v649, 7
        %v651 = vsub.s32 2, %v650
        %v652 = vrot.slane %v269, %v651
        %v656 = vmul.f32 %v637, %v644
        %v657 = vmul.f32 %v638, %v648
        %v658 = vmul.f32 %v639, %v652
        %659 = vset.pattern.permute.xlu0 29
        %660 = vperm.xlu0 %659, %v266
        %v661 = vpop.permute.xlu0 %660
        %v663 = vadd.f32 %v623, %v661
        %v664 = vadd.f32 %v624, %v661
        %v665 = vadd.f32 %v625, %v661
        %666 = vmatprep.subr.mxu0 %v657
        %667 = vmatpush1.xpose.msra.mxu0 %v656
        %668 = vmatprep.subr.mxu0 0.0
        %669 = vmatpush1.xpose.msra.mxu0 0.0
        %670 = vmatprep.subr.mxu0 0.0
        %671 = vmatpush1.xpose.msra.mxu0 0.0
        %672 = vmatprep.subr.mxu0 0.0
        %673 = vmatpush1.xpose.msra.mxu0 0.0
        %674 = vmatprep.subr.mxu0 0.0
        %675 = vmatpush1.xpose.msra.mxu0 0.0
        %676 = vmatprep.subr.mxu0 0.0
        %677 = vmatpush1.xpose.msra.mxu0 0.0
        %678 = vmatprep.subr.mxu0 0.0
        %679 = vmatpush1.xpose.msra.mxu0 0.0
        %680 = vmatprep.subr.mxu0 0.0
        %681 = vmatpush1.xpose.msra.mxu0 0.0
        %682 = vmatprep.subr.mxu0 0.0
        %683 = vmatpush1.xpose.msra.mxu0 0.0
        %684 = vmatprep.subr.mxu0 0.0
        %685 = vmatpush1.xpose.msra.mxu0 0.0
        %686 = vmatprep.subr.mxu0 0.0
        %687 = vmatpush1.xpose.msra.mxu0 0.0
        %688 = vmatprep.subr.mxu0 0.0
        %689 = vmatpush1.xpose.msra.mxu0 0.0
        %690 = vmatprep.subr.mxu0 0.0
        %691 = vmatpush1.xpose.msra.mxu0 0.0
        %692 = vmatprep.subr.mxu0 0.0
        %693 = vmatpush1.xpose.msra.mxu0 0.0
        %694 = vmatprep.subr.mxu0 0.0
        %695 = vmatpush1.xpose.msra.mxu0 0.0
        %696 = vmatprep.subr.mxu0 0.0
        %697 = vmatpush1.xpose.msra.mxu0 0.0
        %698 = vmatprep.subr.mxu0 0.0
        %699 = vmatpush1.xpose.msra.mxu0 0.0
        %700 = vmatprep.subr.mxu0 0.0
        %701 = vmatpush1.xpose.msra.mxu0 0.0
        %702 = vmatprep.subr.mxu0 0.0
        %703 = vmatpush1.xpose.msra.mxu0 0.0
        %704 = vmatprep.subr.mxu0 0.0
        %705 = vmatpush1.xpose.msra.mxu0 0.0
        %706 = vmatprep.subr.mxu0 0.0
        %707 = vmatpush1.xpose.msra.mxu0 0.0
        %708 = vmatprep.subr.mxu0 0.0
        %709 = vmatpush1.xpose.msra.mxu0 0.0
        %710 = vmatprep.subr.mxu0 0.0
        %711 = vmatpush1.xpose.msra.mxu0 0.0
        %712 = vmatprep.subr.mxu0 0.0
        %713 = vmatpush1.xpose.msra.mxu0 0.0
        %714 = vmatprep.subr.mxu0 0.0
        %715 = vmatpush1.xpose.msra.mxu0 0.0
        %716 = vmatprep.subr.mxu0 0.0
        %717 = vmatpush1.xpose.msra.mxu0 0.0
        %718 = vmatprep.subr.mxu0 0.0
        %719 = vmatpush1.xpose.msra.mxu0 0.0
        %720 = vmatprep.subr.mxu0 0.0
        %721 = vmatpush1.xpose.msra.mxu0 0.0
        %722 = vmatprep.subr.mxu0 0.0
        %723 = vmatpush1.xpose.msra.mxu0 0.0
        %724 = vmatprep.subr.mxu0 0.0
        %725 = vmatpush1.xpose.msra.mxu0 0.0
        %726 = vmatprep.subr.mxu0 0.0
        %727 = vmatpush1.xpose.msra.mxu0 0.0
        %728 = vmatprep.subr.mxu0 0.0
        %729 = vmatpush1.xpose.msra.mxu0 0.0
        %730 = vmatprep.mubr.f32.mxu0 %v631
        %731 = vmatmul.mubr.f32.gmra.mrb[0].mxu0 %v630
        %v732 = vpop.f32.mrb[0].mxu0
        %v733 = vadd.f32 %v268, %v732
        %v734 = vpop.f32.mrb[0].mxu0
        %735 = vdwg.mxu0
        %736 = vmatprep.subr.mxu0 0.0
        %737 = vmatpush1.xpose.msra.mxu0 %v658
        %738 = vmatprep.subr.mxu0 0.0
        %739 = vmatpush1.xpose.msra.mxu0 0.0
        %740 = vmatprep.subr.mxu0 0.0
        %741 = vmatpush1.xpose.msra.mxu0 0.0
        %742 = vmatprep.subr.mxu0 0.0
        %743 = vmatpush1.xpose.msra.mxu0 0.0
        %744 = vmatprep.subr.mxu0 0.0
        %745 = vmatpush1.xpose.msra.mxu0 0.0
        %746 = vmatprep.subr.mxu0 0.0
        %747 = vmatpush1.xpose.msra.mxu0 0.0
        %748 = vmatprep.subr.mxu0 0.0
        %749 = vmatpush1.xpose.msra.mxu0 0.0
        %750 = vmatprep.subr.mxu0 0.0
        %751 = vmatpush1.xpose.msra.mxu0 0.0
        %752 = vmatprep.subr.mxu0 0.0
        %753 = vmatpush1.xpose.msra.mxu0 0.0
        %754 = vmatprep.subr.mxu0 0.0
        %755 = vmatpush1.xpose.msra.mxu0 0.0
        %756 = vmatprep.subr.mxu0 0.0
        %757 = vmatpush1.xpose.msra.mxu0 0.0
        %758 = vmatprep.subr.mxu0 0.0
        %759 = vmatpush1.xpose.msra.mxu0 0.0
        %760 = vmatprep.subr.mxu0 0.0
        %761 = vmatpush1.xpose.msra.mxu0 0.0
        %762 = vmatprep.subr.mxu0 0.0
        %763 = vmatpush1.xpose.msra.mxu0 0.0
        %764 = vmatprep.subr.mxu0 0.0
        %765 = vmatpush1.xpose.msra.mxu0 0.0
        %766 = vmatprep.subr.mxu0 0.0
        %767 = vmatpush1.xpose.msra.mxu0 0.0
        %768 = vmatprep.subr.mxu0 0.0
        %769 = vmatpush1.xpose.msra.mxu0 0.0
        %770 = vmatprep.subr.mxu0 0.0
        %771 = vmatpush1.xpose.msra.mxu0 0.0
        %772 = vmatprep.subr.mxu0 0.0
        %773 = vmatpush1.xpose.msra.mxu0 0.0
        %774 = vmatprep.subr.mxu0 0.0
        %775 = vmatpush1.xpose.msra.mxu0 0.0
        %776 = vmatprep.subr.mxu0 0.0
        %777 = vmatpush1.xpose.msra.mxu0 0.0
        %778 = vmatprep.subr.mxu0 0.0
        %779 = vmatpush1.xpose.msra.mxu0 0.0
        %780 = vmatprep.subr.mxu0 0.0
        %781 = vmatpush1.xpose.msra.mxu0 0.0
        %782 = vmatprep.subr.mxu0 0.0
        %783 = vmatpush1.xpose.msra.mxu0 0.0
        %784 = vmatprep.subr.mxu0 0.0
        %785 = vmatpush1.xpose.msra.mxu0 0.0
        %786 = vmatprep.subr.mxu0 0.0
        %787 = vmatpush1.xpose.msra.mxu0 0.0
        %788 = vmatprep.subr.mxu0 0.0
        %789 = vmatpush1.xpose.msra.mxu0 0.0
        %790 = vmatprep.subr.mxu0 0.0
        %791 = vmatpush1.xpose.msra.mxu0 0.0
        %792 = vmatprep.subr.mxu0 0.0
        %793 = vmatpush1.xpose.msra.mxu0 0.0
        %794 = vmatprep.subr.mxu0 0.0
        %795 = vmatpush1.xpose.msra.mxu0 0.0
        %796 = vmatprep.subr.mxu0 0.0
        %797 = vmatpush1.xpose.msra.mxu0 0.0
        %798 = vmatprep.subr.mxu0 0.0
        %799 = vmatpush1.xpose.msra.mxu0 0.0
        %800 = vmatprep.mubr.f32.mxu0 0.0
        %801 = vmatmul.mubr.f32.gmra.mrb[0].mxu0 %v632
        %v802 = vpop.f32.mrb[0].mxu0
        %v803 = vadd.f32 %v733, %v802
        %v804 = vpop.f32.mrb[0].mxu0
        %805 = vdwg.mxu0
        %vm806 = vcmask 64512
        %v807 = vsel %vm806, %v803, -inf
        %808 = vmax.xlane.f32.xlu0 %v807
        %v809 = vpop.xlane.xlu0 %808
        %v810 = vsub.f32 %v803, %v809
        %v811 = vmul.f32 %v810, 1.442695
        %v812 = vpow.pop %v811
        %v813 = vsel %vm806, %v812, 0.0
        %814 = vadd.xlane.f32.xlu0 %v813
        %v815 = vpop.xlane.xlu0 %814
        %v816 = vrcp.pop %v815
        %v817 = vmul.f32 %v812, %v816
        %v819 = vsel %vm806, %v267, 0
        %821 = vmatprep.subr.mxu0 0.0
        %822 = vmatpush1.msra.mxu0 %v817
        %823 = vmatprep.subr.mxu0 0.0
        %824 = vmatpush1.msra.mxu0 0.0
        %825 = vmatprep.subr.mxu0 0.0
        %826 = vmatpush1.msra.mxu0 0.0
        %827 = vmatprep.subr.mxu0 0.0
        %828 = vmatpush1.msra.mxu0 0.0
        %829 = vmatprep.subr.mxu0 0.0
        %830 = vmatpush1.msra.mxu0 0.0
        %831 = vmatprep.subr.mxu0 0.0
        %832 = vmatpush1.msra.mxu0 0.0
        %833 = vmatprep.subr.mxu0 0.0
        %834 = vmatpush1.msra.mxu0 0.0
        %835 = vmatprep.subr.mxu0 0.0
        %836 = vmatpush1.msra.mxu0 0.0
        %837 = vmatprep.subr.mxu0 0.0
        %838 = vmatpush1.msra.mxu0 0.0
        %839 = vmatprep.subr.mxu0 0.0
        %840 = vmatpush1.msra.mxu0 0.0
        %841 = vmatprep.subr.mxu0 0.0
        %842 = vmatpush1.msra.mxu0 0.0
        %843 = vmatprep.subr.mxu0 0.0
        %844 = vmatpush1.msra.mxu0 0.0
        %845 = vmatprep.subr.mxu0 0.0
        %846 = vmatpush1.msra.mxu0 0.0
        %847 = vmatprep.subr.mxu0 0.0
        %848 = vmatpush1.msra.mxu0 0.0
        %849 = vmatprep.subr.mxu0 0.0
        %850 = vmatpush1.msra.mxu0 0.0
        %851 = vmatprep.subr.mxu0 0.0
        %852 = vmatpush1.msra.mxu0 0.0
        %853 = vmatprep.subr.mxu0 0.0
        %854 = vmatpush1.msra.mxu0 0.0
        %855 = vmatprep.subr.mxu0 0.0
        %856 = vmatpush1.msra.mxu0 0.0
        %857 = vmatprep.subr.mxu0 0.0
        %858 = vmatpush1.msra.mxu0 0.0
        %859 = vmatprep.subr.mxu0 0.0
        %860 = vmatpush1.msra.mxu0 0.0
        %861 = vmatprep.subr.mxu0 0.0
        %862 = vmatpush1.msra.mxu0 0.0
        %863 = vmatprep.subr.mxu0 0.0
        %864 = vmatpush1.msra.mxu0 0.0
        %865 = vmatprep.subr.mxu0 0.0
        %866 = vmatpush1.msra.mxu0 0.0
        %867 = vmatprep.subr.mxu0 0.0
        %868 = vmatpush1.msra.mxu0 0.0
        %869 = vmatprep.subr.mxu0 0.0
        %870 = vmatpush1.msra.mxu0 0.0
        %871 = vmatprep.subr.mxu0 0.0
        %872 = vmatpush1.msra.mxu0 0.0
        %873 = vmatprep.subr.mxu0 0.0
        %874 = vmatpush1.msra.mxu0 0.0
        %875 = vmatprep.subr.mxu0 0.0
        %876 = vmatpush1.msra.mxu0 0.0
        %877 = vmatprep.subr.mxu0 0.0
        %878 = vmatpush1.msra.mxu0 0.0
        %879 = vmatprep.subr.mxu0 0.0
        %880 = vmatpush1.msra.mxu0 0.0
        %881 = vmatprep.subr.mxu0 0.0
        %882 = vmatpush1.msra.mxu0 0.0
        %883 = vmatprep.subr.mxu0 0.0
        %884 = vmatpush1.msra.mxu0 0.0
        %885 = vmatprep.mubr.f32.mxu0 0.0
        %886 = vmatmul.mubr.f32.gmra.mrb[0].mxu0 %v819
        %v887 = vpop.f32.mrb[0].mxu0
        %v888 = vadd.f32 0.0, %v887
        %v889 = vpop.f32.mrb[0].mxu0
        %890 = vdwg.mxu0
        %v892 = vsel %vm806, %v888, 0
        %894 = vmatprep.subr.mxu0 %v664
        %895 = vmatpush1.msra.mxu0 %v663
        %896 = vmatprep.subr.mxu0 0.0
        %897 = vmatpush1.msra.mxu0 0.0
        %898 = vmatprep.subr.mxu0 0.0
        %899 = vmatpush1.msra.mxu0 0.0
        %900 = vmatprep.subr.mxu0 0.0
        %901 = vmatpush1.msra.mxu0 0.0
        %902 = vmatprep.subr.mxu0 0.0
        %903 = vmatpush1.msra.mxu0 0.0
        %904 = vmatprep.subr.mxu0 0.0
        %905 = vmatpush1.msra.mxu0 0.0
        %906 = vmatprep.subr.mxu0 0.0
        %907 = vmatpush1.msra.mxu0 0.0
        %908 = vmatprep.subr.mxu0 0.0
        %909 = vmatpush1.msra.mxu0 0.0
        %910 = vmatprep.subr.mxu0 0.0
        %911 = vmatpush1.msra.mxu0 0.0
        %912 = vmatprep.subr.mxu0 0.0
        %913 = vmatpush1.msra.mxu0 0.0
        %914 = vmatprep.subr.mxu0 0.0
        %915 = vmatpush1.msra.mxu0 0.0
        %916 = vmatprep.subr.mxu0 0.0
        %917 = vmatpush1.msra.mxu0 0.0
        %918 = vmatprep.subr.mxu0 0.0
        %919 = vmatpush1.msra.mxu0 0.0
        %920 = vmatprep.subr.mxu0 0.0
        %921 = vmatpush1.msra.mxu0 0.0
        %922 = vmatprep.subr.mxu0 0.0
        %923 = vmatpush1.msra.mxu0 0.0
        %924 = vmatprep.subr.mxu0 0.0
        %925 = vmatpush1.msra.mxu0 0.0
        %926 = vmatprep.subr.mxu0 0.0
        %927 = vmatpush1.msra.mxu0 0.0
        %928 = vmatprep.subr.mxu0 0.0
        %929 = vmatpush1.msra.mxu0 0.0
        %930 = vmatprep.subr.mxu0 0.0
        %931 = vmatpush1.msra.mxu0 0.0
        %932 = vmatprep.subr.mxu0 0.0
        %933 = vmatpush1.msra.mxu0 0.0
        %934 = vmatprep.subr.mxu0 0.0
        %935 = vmatpush1.msra.mxu0 0.0
        %936 = vmatprep.subr.mxu0 0.0
        %937 = vmatpush1.msra.mxu0 0.0
        %938 = vmatprep.subr.mxu0 0.0
        %939 = vmatpush1.msra.mxu0 0.0
        %940 = vmatprep.subr.mxu0 0.0
        %941 = vmatpush1.msra.mxu0 0.0
        %942 = vmatprep.subr.mxu0 0.0
        %943 = vmatpush1.msra.mxu0 0.0
        %944 = vmatprep.subr.mxu0 0.0
        %945 = vmatpush1.msra.mxu0 0.0
        %946 = vmatprep.subr.mxu0 0.0
        %947 = vmatpush1.msra.mxu0 0.0
        %948 = vmatprep.subr.mxu0 0.0
        %949 = vmatpush1.msra.mxu0 0.0
        %950 = vmatprep.subr.mxu0 0.0
        %951 = vmatpush1.msra.mxu0 0.0
        %952 = vmatprep.subr.mxu0 0.0
        %953 = vmatpush1.msra.mxu0 0.0
        %954 = vmatprep.subr.mxu0 0.0
        %955 = vmatpush1.msra.mxu0 0.0
        %956 = vmatprep.subr.mxu0 0.0
        %957 = vmatpush1.msra.mxu0 0.0
        %958 = vmatprep.mubr.f32.mxu0 0.0
        %959 = vmatmul.mubr.f32.gmra.mrb[0].mxu0 %v892
        %v960 = vpop.f32.mrb[0].mxu0
        %v961 = vadd.f32 0.0, %v960
        %v962 = vpop.f32.mrb[0].mxu0
        %v963 = vadd.f32 0.0, %v962
        %964 = vdwg.mxu0
        %965 = vmatprep.subr.mxu0 0.0
        %966 = vmatpush1.msra.mxu0 %v665
        %967 = vmatprep.subr.mxu0 0.0
        %968 = vmatpush1.msra.mxu0 0.0
        %969 = vmatprep.subr.mxu0 0.0
        %970 = vmatpush1.msra.mxu0 0.0
        %971 = vmatprep.subr.mxu0 0.0
        %972 = vmatpush1.msra.mxu0 0.0
        %973 = vmatprep.subr.mxu0 0.0
        %974 = vmatpush1.msra.mxu0 0.0
        %975 = vmatprep.subr.mxu0 0.0
        %976 = vmatpush1.msra.mxu0 0.0
        %977 = vmatprep.subr.mxu0 0.0
        %978 = vmatpush1.msra.mxu0 0.0
        %979 = vmatprep.subr.mxu0 0.0
        %980 = vmatpush1.msra.mxu0 0.0
        %981 = vmatprep.subr.mxu0 0.0
        %982 = vmatpush1.msra.mxu0 0.0
        %983 = vmatprep.subr.mxu0 0.0
        %984 = vmatpush1.msra.mxu0 0.0
        %985 = vmatprep.subr.mxu0 0.0
        %986 = vmatpush1.msra.mxu0 0.0
        %987 = vmatprep.subr.mxu0 0.0
        %988 = vmatpush1.msra.mxu0 0.0
        %989 = vmatprep.subr.mxu0 0.0
        %990 = vmatpush1.msra.mxu0 0.0
        %991 = vmatprep.subr.mxu0 0.0
        %992 = vmatpush1.msra.mxu0 0.0
        %993 = vmatprep.subr.mxu0 0.0
        %994 = vmatpush1.msra.mxu0 0.0
        %995 = vmatprep.subr.mxu0 0.0
        %996 = vmatpush1.msra.mxu0 0.0
        %997 = vmatprep.subr.mxu0 0.0
        %998 = vmatpush1.msra.mxu0 0.0
        %999 = vmatprep.subr.mxu0 0.0
        %1000 = vmatpush1.msra.mxu0 0.0
        %1001 = vmatprep.subr.mxu0 0.0
        %1002 = vmatpush1.msra.mxu0 0.0
        %1003 = vmatprep.subr.mxu0 0.0
        %1004 = vmatpush1.msra.mxu0 0.0
        %1005 = vmatprep.subr.mxu0 0.0
        %1006 = vmatpush1.msra.mxu0 0.0
        %1007 = vmatprep.subr.mxu0 0.0
        %1008 = vmatpush1.msra.mxu0 0.0
        %1009 = vmatprep.subr.mxu0 0.0
        %1010 = vmatpush1.msra.mxu0 0.0
        %1011 = vmatprep.subr.mxu0 0.0
        %1012 = vmatpush1.msra.mxu0 0.0
        %1013 = vmatprep.subr.mxu0 0.0
        %1014 = vmatpush1.msra.mxu0 0.0
        %1015 = vmatprep.subr.mxu0 0.0
        %1016 = vmatpush1.msra.mxu0 0.0
        %1017 = vmatprep.subr.mxu0 0.0
        %1018 = vmatpush1.msra.mxu0 0.0
        %1019 = vmatprep.subr.mxu0 0.0
        %1020 = vmatpush1.msra.mxu0 0.0
        %1021 = vmatprep.subr.mxu0 0.0
        %1022 = vmatpush1.msra.mxu0 0.0
        %1023 = vmatprep.subr.mxu0 0.0
        %1024 = vmatpush1.msra.mxu0 0.0
        %1025 = vmatprep.subr.mxu0 0.0
        %1026 = vmatpush1.msra.mxu0 0.0
        %1027 = vmatprep.subr.mxu0 0.0
        %1028 = vmatpush1.msra.mxu0 0.0
        %1029 = vmatprep.mubr.f32.mxu0 0.0
        %1030 = vmatmul.mubr.f32.gmra.mrb[0].mxu0 %v892
        %v1031 = vpop.f32.mrb[0].mxu0
        %v1032 = vadd.f32 0.0, %v1031
        %v1033 = vpop.f32.mrb[0].mxu0
        %1034 = vdwg.mxu0
        %1035 = vset.pattern.permute.xlu0 30
        %1036 = vperm.xlu0 %1035, %v266
        %v1037 = vpop.permute.xlu0 %1036
        %v1039 = vmul.f32 %v961, %v1037
        %v1040 = vmul.f32 %v963, %v1037
        %v1041 = vmul.f32 %v1032, %v1037
        %1042 = vset.pattern.permute.xlu0 31
        %1043 = vperm.xlu0 %1042, %v266
        %v1044 = vpop.permute.xlu0 %1043
        %v1046 = vadd.f32 %v1039, %v1044
        %v1047 = vadd.f32 %v1040, %v1044
        %v1048 = vadd.f32 %v1041, %v1044
        %1049 = vst [vmem:[%s265] sm:$0xff] %v1046
        %1050 = vst [vmem:[%s265 + $0x8] sm:$0xff] %v1047
        %1051 = vst [vmem:[%s265 + $0x10] sm:$0xff] %v1048
        %s1052 = sand.u32 %s141, 1
        %s1053 = scalar_lea.sflag [#allocation4], %s1052
        %s1054 = sand.u32 %s141, 1
        %s1055 = smul.addr %s1054, 24
        %s1056 = scalar_lea.vmem [#allocation8], %s1055
        // Predicated region
        $region53: #{tpu_custom_call.1} parent=39 // pred_check
          %p1057 = pneg %p151
        $region54: #{tpu_custom_call.1} parent=39 // pred_check_branch
          %1059 = sbr.rel (%p1057) target = $region56
        $region55: #{tpu_custom_call.1} parent=39 // pred_region
          %s1061 = ssub.s32 384, 384
          %1062 = vsyncadd %s1053, %s1061
          %s1063 = smul.addr %s23, 3
          %s1064 = smul.addr %s1063, 128
          %s1065 = scalar_lea.hbm %s5, %s1064
          %s1067 = sshll.u32 %s1056, 4
          %s1068 = int_to_ptr.vmem [resolvable:$true] %s1067
          %1070 = dma.vmem_to_hbm [thread:$0]  %s1068, 384, %s1065, %s1053
        $region56: #{tpu_custom_call.1} parent=39 // pred_fallthru
          _
      $region40: #{tpu_custom_call.1} parent=5 // pred_fallthru
        _
      %p1071 = scmp.le.s32.totalorder 2, %s18
      // Predicated region
      $region57: #{tpu_custom_call.1} parent=5 // pred_check
        %p1072 = pneg %p1071
      $region58: #{tpu_custom_call.1} parent=5 // pred_check_branch
        %1074 = sbr.rel (%p1072) target = $region60
      $region59: #{tpu_custom_call.1} parent=5 // pred_region
        %s1075 = ssub.s32 %s18, 2
        // Predicated region
        $region61: #{tpu_custom_call.1} parent=59 // pred_check
          %p1076 = pneg %p157
        $region62: #{tpu_custom_call.1} parent=59 // pred_check_branch
          %1078 = sbr.rel (%p1076) target = $region64
        $region63: #{tpu_custom_call.1} parent=59 // pred_region
          %s1079 = sand.u32 %s142, 1
          %s1080 = scalar_lea.sflag [#allocation4], %s1079
          %s1081 = sand.u32 %s142, 1
          %s1082 = smul.addr %s1081, 24
          %s1083 = scalar_lea.vmem [#allocation8], %s1082
          %1084 = dma.done %s1080, 384
        $region64: #{tpu_custom_call.1} parent=59 // pred_fallthru
          _
      $region60: #{tpu_custom_call.1} parent=5 // pred_fallthru
        _
    $region6: #{tpu_custom_call.1} parent=1 // loop_footer
      %s22 = sadd.s32 1, %s18
    $region7: #{tpu_custom_call.1} parent=1 // loop_footer_branch
      %17 = sbr.rel target = $region3
    $region8: #{tpu_custom_call.1} parent=1 // loop_exit
      _
    %1085 = vsyncpa [#allocation3], 1
    %s1086 = scalar_lea.sflag [#allocation3], 1
    %1087 = vsyncpa %s1086, 1
    %1088 = vsyncpa [#allocation6], 1
    %1089 = vsyncpa [#allocation4], 1
    %s1090 = scalar_lea.sflag [#allocation4], 1
    %1091 = vsyncpa %s1090, 1

</llo_original>
